<compile_context>
chip_gen: v7x
topology: tpu7x:2x2x1
jax: 0.10.0
libtpu: 0.0.40
codegen_flags: <defaults>
</compile_context>

<pallas_src>
import functools

import jax
import jax.numpy as jnp
from jax.experimental import pallas as pl
from jax.experimental.pallas import tpu as pltpu


def _ce_smooth_kernel(logits_ref, targets_ref, out_ref, acc_ref, *,
                      eps: float, batch: int, block_b: int):
    """One batch tile of smoothed cross entropy, accumulated into SMEM.

    logits_ref : (TB, K) float (native dtype) -- VMEM
    targets_ref: (TB, 1) int32               -- VMEM
    out_ref    : (1, 1) float32              -- SMEM (scalar result)
    acc_ref    : (1,)   float32              -- SMEM scratch accumulator
    """
    i = pl.program_id(0)
    nsteps = pl.num_programs(0)

    @pl.when(i == 0)
    def _init():
        acc_ref[0] = jnp.float32(0.0)

    x = logits_ref[...].astype(jnp.float32)               # (TB, K)
    t = targets_ref[...]                                   # (TB, 1) int32
    tb, k = x.shape

    # Numerically-stable logsumexp over classes.
    m = jnp.max(x, axis=1, keepdims=True)                  # (TB, 1)
    lse = jnp.log(jnp.sum(jnp.exp(x - m), axis=1, keepdims=True))
    log_z = m + lse                                        # (TB, 1)

    # x_t = logit at the target class (fused one-hot gather, no (TB,K) temporaries kept).
    col = jax.lax.broadcasted_iota(jnp.int32, x.shape, 1)  # (TB, K)
    x_t = jnp.sum(jnp.where(col == t, x, 0.0), axis=1, keepdims=True)   # (TB, 1)
    row_sum = jnp.sum(x, axis=1, keepdims=True)            # (TB, 1)

    # -(smoothed_onehot . log_softmax(x)) per row, fully fused:
    row_loss = (1.0 - eps) * (log_z - x_t) + (eps / k) * (k * log_z - row_sum)

    # Mask padded rows of a ragged last tile.
    row_idx = i * block_b + jax.lax.broadcasted_iota(jnp.int32, row_loss.shape, 0)
    row_loss = jnp.where(row_idx < batch, row_loss, 0.0)

    acc_ref[0] += jnp.sum(row_loss)

    @pl.when(i == nsteps - 1)
    def _finalize():
        # mean over the FULL batch (not the tile), then already summed over classes.
        out_ref[0, 0] = acc_ref[0] * (1.0 / batch)


def cross_entropy_loss(inputs, targets, eps=0.1, label_smooth=True, block_b=None):
    """JAX/Pallas equivalent of CrossEntropyLoss.forward(inputs, targets).

    inputs : (batch, num_classes) float array (pre-softmax logits, any float dtype)
    targets: (batch,) integer class indices
    """
    # TODO(synk): the optional `weights` argument path (per-sample L1-normalized
    # weighting) is not implemented; only the default weights=None path is.
    # TODO(synk): forward-only (no custom_vjp); training use needs a backward kernel.
    assert inputs.shape[0] == targets.shape[0]
    e = float(eps) if label_smooth else 0.0

    b, k = inputs.shape
    targets2d = targets.astype(jnp.int32).reshape(b, 1)

    itemsize = jnp.dtype(inputs.dtype).itemsize
    # sublane packing granularity: 8 rows for f32, 16 for bf16, 32 for int8/fp8
    sub = max(8, 8 * (4 // max(1, itemsize)))

    if block_b is None:
        # Keep a double-buffered logits tile comfortably inside every generation's VMEM
        # (v7x has only 64 MiB physical): ~12 MiB per buffer -> 24 MiB double-buffered.
        budget_per_buf = 12 * 1024 * 1024
        tb = max(sub, budget_per_buf // max(1, k * itemsize))
        tb = min(b, 1024, tb)
    else:
        tb = min(b, int(block_b))
    if tb != b:
        tb = max(sub, (tb // sub) * sub)   # (8,128)-rule: multiple of sublane pack, or full B

    grid = (pl.cdiv(b, tb),)

    # TODO(synk): for very large class counts (K >> 16K) add a second 'arbitrary' K axis
    # with an online logsumexp to keep tiles small; single-pass over K is fine here.

    cost = pl.CostEstimate(
        flops=int(8 * b * k),
        transcendentals=int(b * k),
        bytes_accessed=int(b * k * itemsize + b * 4 + 4),
    )

    out = pl.pallas_call(
        functools.partial(_ce_smooth_kernel, eps=e, batch=b, block_b=tb),
        out_shape=jax.ShapeDtypeStruct((1, 1), jnp.float32),
        grid=grid,
        in_specs=[
            pl.BlockSpec((tb, k), lambda i: (i, 0)),   # logits tile (native dtype, VMEM)
            pl.BlockSpec((tb, 1), lambda i: (i, 0)),   # targets tile (VMEM)
        ],
        out_specs=pl.BlockSpec(memory_space=pltpu.SMEM),      # scalar result in SMEM
        scratch_shapes=[pltpu.SMEM((1,), jnp.float32)],       # running sum across tiles
        compiler_params=pltpu.CompilerParams(
            dimension_semantics=("arbitrary",),   # batch axis is a reduction (accumulator)
            vmem_limit_bytes=40 * 1024 * 1024,    # safe on v5e/v6e/v7x
        ),
        cost_estimate=cost,
    )(inputs, targets2d)
    return out[0, 0]


def _reference(inputs, targets, eps=0.1):
    """Pure-JAX reference for verification."""
    k = inputs.shape[1]
    log_probs = jax.nn.log_softmax(inputs.astype(jnp.float32), axis=1)
    onehot = jax.nn.one_hot(targets, k, dtype=jnp.float32)
    smoothed = (1.0 - eps) * onehot + eps / k
    return jnp.sum(jnp.mean(-smoothed * log_probs, axis=0))


if __name__ == "__main__":
    key = jax.random.PRNGKey(0)
    k_logits, k_tgt = jax.random.split(key)

    # Small shapes matching the module's (batch, num_classes) convention.
    batch, num_classes = 8, 32
    logits = jax.random.normal(k_logits, (batch, num_classes), dtype=jnp.float32)
    targets = jax.random.randint(k_tgt, (batch,), 0, num_classes, dtype=jnp.int32)

    loss = jax.block_until_ready(cross_entropy_loss(logits, targets, eps=0.1, label_smooth=True))
    ref = _reference(logits, targets, eps=0.1)
    assert jnp.allclose(loss, ref, rtol=1e-5, atol=1e-5), (loss, ref)

    # Multi-tile path with a ragged last tile (grid of 3, masked tail), f32.
    kl2, kt2 = jax.random.split(jax.random.PRNGKey(1))
    b2, k2 = 20, 160
    logits2 = jax.random.normal(kl2, (b2, k2), dtype=jnp.float32)
    targets2 = jax.random.randint(kt2, (b2,), 0, k2, dtype=jnp.int32)
    loss2 = jax.block_until_ready(cross_entropy_loss(logits2, targets2, eps=0.1, block_b=8))
    ref2 = _reference(logits2, targets2, eps=0.1)
    assert jnp.allclose(loss2, ref2, rtol=1e-4, atol=1e-4), (loss2, ref2)

    # Native bf16 logits (no wrapper upcast) + multi-tile.
    kl3, kt3 = jax.random.split(jax.random.PRNGKey(2))
    b3, k3 = 40, 256
    logits3 = jax.random.normal(kl3, (b3, k3), dtype=jnp.bfloat16)
    targets3 = jax.random.randint(kt3, (b3,), 0, k3, dtype=jnp.int32)
    loss3 = jax.block_until_ready(cross_entropy_loss(logits3, targets3, eps=0.1, block_b=16))
    ref3 = _reference(logits3, targets3, eps=0.1)
    assert jnp.allclose(loss3, ref3, rtol=1e-3, atol=1e-3), (loss3, ref3)

    # eps = 0 (label_smooth=False) reduces to plain cross entropy.
    loss4 = jax.block_until_ready(cross_entropy_loss(logits, targets, label_smooth=False))
    ref4 = _reference(logits, targets, eps=0.0)
    assert jnp.allclose(loss4, ref4, rtol=1e-5, atol=1e-5), (loss4, ref4)

    print("KERNEL_OK")
</pallas_src>

<mosaic_0001>
module attributes {stable_mosaic.version = 11 : i64} {
  func.func @_ce_smooth_kernel(%arg0: i32, %arg1: memref<8x32xf32, #tpu.memory_space<vmem>>, %arg2: memref<8x1xi32, #tpu.memory_space<vmem>>, %arg3: memref<1x1xf32, #tpu.memory_space<smem>>, %arg4: memref<1xf32, #tpu.memory_space<smem>>) attributes {dimension_semantics = [#tpu.dimension_semantics<arbitrary>], iteration_bounds = array<i64: 1>, scalar_prefetch = 0 : i64, scratch_operands = 1 : i64, tpu.core_type = #tpu.core_type<tc>, window_params = [{transform_indices = @transform_0, window_bounds = array<i64: 8, 32>}, {transform_indices = @transform_1, window_bounds = array<i64: 8, 1>}, {transform_indices = @transform_2, window_bounds = array<i64: 1, 1>}]} {
    %c0_i32 = arith.constant 0 : i32
    %0 = arith.cmpi eq, %arg0, %c0_i32 : i32
    %1 = arith.extui %0 : i1 to i32
    %c0_i32_0 = arith.constant 0 : i32
    %2 = arith.cmpi ne, %1, %c0_i32_0 : i32
    scf.if %2 {
      %cst_18 = arith.constant 0.000000e+00 : f32
      %c0_19 = arith.constant 0 : index
      %50 = memref.load %arg4[%c0_19] : memref<1xf32, #tpu.memory_space<smem>>
      memref.store %cst_18, %arg4[%c0_19] : memref<1xf32, #tpu.memory_space<smem>>
    } else {
    }
    %c0 = arith.constant 0 : index
    %c0_1 = arith.constant 0 : index
    %3 = vector.load %arg1[%c0, %c0_1] : memref<8x32xf32, #tpu.memory_space<vmem>>, vector<8x32xf32>
    %c0_2 = arith.constant 0 : index
    %c0_3 = arith.constant 0 : index
    %4 = vector.load %arg2[%c0_2, %c0_3] : memref<8x1xi32, #tpu.memory_space<vmem>>, vector<8x1xi32>
    %cst = arith.constant dense<0xFF800000> : vector<8xf32>
    %5 = vector.multi_reduction <maximumf>, %3, %cst [1] : vector<8x32xf32> to vector<8xf32>
    %6 = vector.shape_cast %5 : vector<8xf32> to vector<8x1xf32>
    %7 = vector.broadcast %6 : vector<8x1xf32> to vector<8x32xf32>
    %8 = arith.subf %3, %7 : vector<8x32xf32>
    %9 = math.exp %8 : vector<8x32xf32>
    %cst_4 = arith.constant dense<0.000000e+00> : vector<8xf32>
    %10 = vector.multi_reduction <add>, %9, %cst_4 [1] : vector<8x32xf32> to vector<8xf32>
    %11 = vector.shape_cast %10 : vector<8xf32> to vector<8x1xf32>
    %12 = math.log %11 : vector<8x1xf32>
    %13 = arith.addf %6, %12 : vector<8x1xf32>
    %14 = tpu.iota {dimensions = array<i32: 1>} : vector<8x32xi32>
    %15 = vector.broadcast %4 : vector<8x1xi32> to vector<8x32xi32>
    %16 = arith.cmpi eq, %14, %15 : vector<8x32xi32>
    %cst_5 = arith.constant 0.000000e+00 : f32
    %17 = vector.broadcast %cst_5 : f32 to vector<8x32xf32>
    %18 = arith.select %16, %3, %17 : vector<8x32xi1>, vector<8x32xf32>
    %cst_6 = arith.constant dense<0.000000e+00> : vector<8xf32>
    %19 = vector.multi_reduction <add>, %18, %cst_6 [1] : vector<8x32xf32> to vector<8xf32>
    %20 = vector.shape_cast %19 : vector<8xf32> to vector<8x1xf32>
    %cst_7 = arith.constant dense<0.000000e+00> : vector<8xf32>
    %21 = vector.multi_reduction <add>, %3, %cst_7 [1] : vector<8x32xf32> to vector<8xf32>
    %22 = vector.shape_cast %21 : vector<8xf32> to vector<8x1xf32>
    %23 = arith.subf %13, %20 : vector<8x1xf32>
    %cst_8 = arith.constant 0.899999976 : f32
    %24 = vector.broadcast %cst_8 : f32 to vector<8x1xf32>
    %25 = arith.mulf %24, %23 : vector<8x1xf32>
    %cst_9 = arith.constant 3.200000e+01 : f32
    %26 = vector.broadcast %cst_9 : f32 to vector<8x1xf32>
    %27 = arith.mulf %26, %13 : vector<8x1xf32>
    %28 = arith.subf %27, %22 : vector<8x1xf32>
    %cst_10 = arith.constant 3.125000e-03 : f32
    %29 = vector.broadcast %cst_10 : f32 to vector<8x1xf32>
    %30 = arith.mulf %29, %28 : vector<8x1xf32>
    %31 = arith.addf %25, %30 : vector<8x1xf32>
    %c8_i32 = arith.constant 8 : i32
    %32 = arith.muli %arg0, %c8_i32 : i32
    %33 = tpu.iota {dimensions = array<i32: 0>} : vector<8x1xi32>
    %34 = vector.broadcast %32 : i32 to vector<8x1xi32>
    %35 = arith.addi %34, %33 : vector<8x1xi32>
    %c8_i32_11 = arith.constant 8 : i32
    %36 = vector.broadcast %c8_i32_11 : i32 to vector<8x1xi32>
    %37 = arith.cmpi slt, %35, %36 : vector<8x1xi32>
    %cst_12 = arith.constant 0.000000e+00 : f32
    %38 = vector.broadcast %cst_12 : f32 to vector<8x1xf32>
    %39 = arith.select %37, %31, %38 : vector<8x1xi1>, vector<8x1xf32>
    %c0_13 = arith.constant 0 : index
    %40 = memref.load %arg4[%c0_13] : memref<1xf32, #tpu.memory_space<smem>>
    %41 = vector.shape_cast %39 : vector<8x1xf32> to vector<1x8x1xf32>
    %cst_14 = arith.constant dense<0.000000e+00> : vector<1xf32>
    %42 = vector.multi_reduction <add>, %41, %cst_14 [1, 2] : vector<1x8x1xf32> to vector<1xf32>
    %43 = vector.shape_cast %42 : vector<1xf32> to vector<1x1x1xf32>
    %44 = vector.extract %43[0, 0, 0] : f32 from vector<1x1x1xf32>
    %45 = arith.addf %40, %44 : f32
    %c0_15 = arith.constant 0 : index
    %46 = memref.load %arg4[%c0_15] : memref<1xf32, #tpu.memory_space<smem>>
    memref.store %45, %arg4[%c0_15] : memref<1xf32, #tpu.memory_space<smem>>
    %c0_i32_16 = arith.constant 0 : i32
    %47 = arith.cmpi eq, %arg0, %c0_i32_16 : i32
    %48 = arith.extui %47 : i1 to i32
    %c0_i32_17 = arith.constant 0 : i32
    %49 = arith.cmpi ne, %48, %c0_i32_17 : i32
    scf.if %49 {
      %c0_18 = arith.constant 0 : index
      %50 = memref.load %arg4[%c0_18] : memref<1xf32, #tpu.memory_space<smem>>
      %cst_19 = arith.constant 1.250000e-01 : f32
      %51 = arith.mulf %50, %cst_19 : f32
      %c0_20 = arith.constant 0 : index
      %c0_21 = arith.constant 0 : index
      %52 = memref.load %arg3[%c0_20, %c0_21] : memref<1x1xf32, #tpu.memory_space<smem>>
      memref.store %51, %arg3[%c0_20, %c0_21] : memref<1x1xf32, #tpu.memory_space<smem>>
    } else {
    }
    return
  }
  func.func @transform_0(%arg0: i32) -> (i32, i32) {
    %c0_i32 = arith.constant 0 : i32
    %c0_i32_0 = arith.constant 0 : i32
    return %arg0, %c0_i32 : i32, i32
  }
  func.func @transform_1(%arg0: i32) -> (i32, i32) {
    %c0_i32 = arith.constant 0 : i32
    %c0_i32_0 = arith.constant 0 : i32
    return %arg0, %c0_i32 : i32, i32
  }
  func.func @transform_2(%arg0: i32) -> (i32, i32) {
    %c0_i32 = arith.constant 0 : i32
    %c0_i32_0 = arith.constant 0 : i32
    %c0_i32_1 = arith.constant 0 : i32
    return %c0_i32, %c0_i32_0 : i32, i32
  }
}

</mosaic_0001>

<llo_original>
// kernel: tpu_custom_call.1
$region0: #{tpu_custom_call.1}
  #allocation0 [shape = 'u32[]', space=smem, size = 0x4, offset = 0x4, fixed_abs, tag = 'smem constant byte address 0x4 - core index']
  #allocation1 [shape = 'u32[144,128]{1,0:T(1,128)}', space=vmem, size = 0x12000, scoped, tag = 'internal scratch']
  #allocation2 [shape = 'f32[1]{0:T(128)}', space=smem, size = 0x200, scoped, tag = 'scratch operand']
  %s0 = inlined_call_operand.vmem [shape: f32[8,32], index: 0, kind: input, shape index: {}]
  %s1 = inlined_call_operand.vmem [shape: s32[8,1], index: 1, kind: input, shape index: {}]
  %s2 = inlined_call_operand.hbm [shape: f32[1,1], index: 2, kind: output, shape index: {}]
  %s3 = sld [smem:[#allocation0]]
  $region26: #{tpu_custom_call.1} parent=0
    _
  %s5 = ssub.s32 1, %s3
  %s6 = scalar_select 0, %s5, %s3
  $region1: #{tpu_custom_call.1} parent=0
    #allocation3 [shape = 'u8[512]{0}', space=smem, size = 0x200, scoped, tag = 'output window, operand 0, single buffered']
    #allocation4 [shape = 's32[1]{0}', space=sflag, size = 0x4, scoped, tag = 'scoped memory for tpu_custom_call.1']
    %7 = vsyncpa [#allocation4], 0
    // Predicated region
    $region2: #{tpu_custom_call.1} parent=1 // pred_check
      _
    $region3: #{tpu_custom_call.1} parent=1 // pred_check_branch
      %9 = sbr.rel (0) target = $region5
    $region4: #{tpu_custom_call.1} parent=1 // pred_region
      _
    $region5: #{tpu_custom_call.1} parent=1 // pred_fallthru
      _
    // Predicated region
    $region6: #{tpu_custom_call.1} parent=1 // pred_check
      _
    $region7: #{tpu_custom_call.1} parent=1 // pred_check_branch
      %11 = sbr.rel (0) target = $region9
    $region8: #{tpu_custom_call.1} parent=1 // pred_region
      _
    $region9: #{tpu_custom_call.1} parent=1 // pred_fallthru
      _
    %p12 = scmp.eq.s32.totalorder 0, 0
    // Predicated region
    $region10: #{tpu_custom_call.1} parent=1 // pred_check
      %p13 = pneg %p12
    $region11: #{tpu_custom_call.1} parent=1 // pred_check_branch
      %15 = sbr.rel (%p13) target = $region13
    $region12: #{tpu_custom_call.1} parent=1 // pred_region
      %s16 = scalar_lea.smem [#allocation2], 0
      %17 = sst [smem:[%s16]] 0.0
    $region13: #{tpu_custom_call.1} parent=1 // pred_fallthru
      _
    %v18 = vld [vmem:[%s0] sm:$0xff]
    %v19 = vld [vmem:[%s1] sm:$0xff]
    %vm20 = vcmask 261120
    %v21 = vsel %vm20, %v18, -inf
    %22 = vmax.xlane.f32.xlu0 %v21
    %v23 = vpop.xlane.xlu0 %22
    %v24 = vsub.f32 %v18, %v23
    %v25 = vmul.f32 %v24, 1.442695
    %v26 = vpow.pop %v25
    %v27 = vsel %vm20, %v26, 0.0
    %28 = vadd.xlane.f32.xlu0 %v27
    %v29 = vpop.xlane.xlu0 %28
    %v30 = vlog2.pop %v29
    %v31 = vmul.f32 %v30, 0.6931472
    %v32 = vadd.f32 %v23, %v31
    %v33 = vlaneseq
    %v34 = vand.u32 %v33, 127
    %35 = vset.pattern.permute.xlu0 0
    %36 = vperm.xlu0 %35, %v19
    %v37 = vpop.permute.xlu0 %36
    %vm38 = vcmp.eq.s32.totalorder %v34, %v37
    %v39 = vsel %vm38, %v18, 0.0
    %v40 = vsel %vm20, %v39, 0.0
    %41 = vadd.xlane.f32.xlu0 %v40
    %v42 = vpop.xlane.xlu0 %41
    %v43 = vsel %vm20, %v18, 0.0
    %44 = vadd.xlane.f32.xlu0 %v43
    %v45 = vpop.xlane.xlu0 %44
    %v46 = vsub.f32 %v32, %v42
    %v47 = vmul.f32 %v46, 0.9
    %v48 = vmul.f32 %v32, 32.0
    %v49 = vsub.f32 %v48, %v45
    %v50 = vmul.f32 %v49, 0.003125
    %v51 = vadd.f32 %v47, %v50
    %s52 = smul.u32 0, 8
    %v53 = vlaneseq
    %v54 = vshrl.u32 %v53, 7
    %v55 = vstv %s52
    %v56 = vadd.s32 %v55, %v54
    %vm57 = vcmp.lt.s32.totalorder %v56, 8
    %v58 = vsel %vm57, %v51, 0.0
    %s59 = sld [smem:[#allocation2]]
    %vm60 = vcmask 7168
    %v61 = vsel %vm60, %v58, 0.0
    %62 = vadd.xlane.f32.xlu0 %v61
    %v63 = vpop.xlane.xlu0 %62
    %v64 = vrot.slane %v63, 4
    %v65 = vadd.f32 %v63, %v64
    %v66 = vrot.slane %v65, 2
    %v67 = vadd.f32 %v65, %v66
    %v68 = vrot.slane %v67, 1
    %v69 = vadd.f32 %v67, %v68
    %s70 = vtos %v69
    %s71 = sadd.f32 %s59, %s70
    %s72 = scalar_lea.smem [#allocation2], 0
    %73 = sst [smem:[%s72]] %s71
    // Predicated region
    $region14: #{tpu_custom_call.1} parent=1 // pred_check
      %p74 = pneg %p12
    $region15: #{tpu_custom_call.1} parent=1 // pred_check_branch
      %76 = sbr.rel (%p74) target = $region17
    $region16: #{tpu_custom_call.1} parent=1 // pred_region
      %s77 = sld [smem:[#allocation2]]
      %s78 = smul.f32 %s77, 0.125
      %s79 = scalar_lea.smem [#allocation3], 0
      %80 = sst [smem:[%s79]] %s78
    $region17: #{tpu_custom_call.1} parent=1 // pred_fallthru
      _
    // Predicated region
    $region18: #{tpu_custom_call.1} parent=1 // pred_check
      _
    $region19: #{tpu_custom_call.1} parent=1 // pred_check_branch
      %82 = sbr.rel (0) target = $region21
    $region20: #{tpu_custom_call.1} parent=1 // pred_region
      %s84 = ssub.s32 16, 16
      %85 = vsyncadd [#allocation4], %s84
      %88 = dma.smem_to_hbm [#allocation3], 16, %s2, [#allocation4]
    $region21: #{tpu_custom_call.1} parent=1 // pred_fallthru
      _
    // Predicated region
    $region22: #{tpu_custom_call.1} parent=1 // pred_check
      _
    $region23: #{tpu_custom_call.1} parent=1 // pred_check_branch
      %90 = sbr.rel (0) target = $region25
    $region24: #{tpu_custom_call.1} parent=1 // pred_region
      %91 = dma.done [#allocation4], 16
    $region25: #{tpu_custom_call.1} parent=1 // pred_fallthru
      _
    %92 = sfence
    %93 = vsyncpa [#allocation4], 1

</llo_original>
